<compile_context>
chip_gen: v5e
topology: v5e:2x2
jax: 0.10.0
libtpu: 0.0.40
codegen_flags: <defaults>
</compile_context>

<pallas_src>
import numpy as np
import jax
import jax.numpy as jnp
from jax.experimental import pallas as pl
from jax.experimental.pallas import tpu as pltpu


def _round_up(a: int, b: int) -> int:
    return (a + b - 1) // b * b


def _make_pep_kernel(field_num: int, n_pad: int, latent_dim: int, block_rows: int):
    F, NP, D, TB = field_num, n_pad, latent_dim, block_rows
    FN, FD = F * NP, F * D

    def kernel(off_ref, x_ref, thi_ref, tmid_ref, tlo_ref, o_ref):
        # off_ref : (F,)      int32  SMEM  offsets[f] + f*NP  (scalar prefetch)
        # x_ref   : (TB, F)   int32  VMEM  raw per-field indices (pipelined)
        # t*_ref  : (FN, FD)  bf16   VMEM  block-diag table chunks (resident)
        # o_ref   : (TB, FD)  f32    VMEM  lane-dense output tile (pipelined)
        x_tile = x_ref[...]                                         # (TB, F)
        col = jax.lax.broadcasted_iota(jnp.int32, (TB, FN), 1)      # hoisted
        match = col == (x_tile[:, 0:1] + off_ref[0])
        for f in range(1, F):                                       # static, small F
            match = jnp.logical_or(match, col == (x_tile[:, f:f + 1] + off_ref[f]))
        onehot = match.astype(jnp.bfloat16)                         # 0/1 exact in bf16

        # Three DEFAULT bf16 MXU passes accumulated in f32; each one-hot row
        # selects a single table row, so hi+mid+lo reconstructs f32 exactly.
        acc = jnp.dot(onehot, thi_ref[...], preferred_element_type=jnp.float32)
        acc = acc + jnp.dot(onehot, tmid_ref[...], preferred_element_type=jnp.float32)
        acc = acc + jnp.dot(onehot, tlo_ref[...], preferred_element_type=jnp.float32)
        o_ref[...] = acc.astype(o_ref.dtype)

    return kernel


def pep_embedding_forward(x, v, s, offsets, gk, *, block_rows=2048):
    """PEPEmbedding.forward (threshold_type='dimension', retrain=False).

    x:       (B, F) int   per-field raw indices
    v:       (feature_num, D) float32 embedding table
    s:       (D,) float32 threshold parameter
    offsets: (F,) int     cumulative field offsets
    """
    B, F = x.shape
    N, D = v.shape
    f32 = jnp.float32

    # ---- Table prep (batch-independent; done once in XLA, not per output row).
    v32 = v.astype(f32)
    thr = jax.nn.sigmoid(s.astype(f32))[None, :] * gk                  # (1, D), >= 0
    sparse_v = jnp.sign(v32) * jnp.maximum(jnp.abs(v32) - thr, 0.0)    # (N, D)

    NP = _round_up(N, 8)
    if NP != N:
        sparse_v = jnp.pad(sparse_v, ((0, NP - N), (0, 0)))            # padded rows = 0
    FN, FD = F * NP, F * D

    # Block-diagonal table -> one fused MXU matmul yields all F fields at once.
    blockdiag = jnp.kron(jnp.eye(F, dtype=f32), sparse_v)              # (FN, FD)

    # Exact 3-way bf16 split of the f32 table.
    t_hi = blockdiag.astype(jnp.bfloat16)
    r1 = blockdiag - t_hi.astype(f32)
    t_mid = r1.astype(jnp.bfloat16)
    t_lo = (r1 - t_mid.astype(f32)).astype(jnp.bfloat16)

    # Combined per-field offset: field start in the table + field block base.
    comb_off = offsets.astype(jnp.int32) + jnp.arange(F, dtype=jnp.int32) * NP

    # ---- Batch tiling: large tiles, but keep >= 2 grid steps when B allows.
    TB = max(8, min(block_rows, _round_up(max(-(-B // 2), 1), 8)))
    B_pad = _round_up(B, TB)
    x_i32 = x.astype(jnp.int32)
    if B_pad != B:
        # Padded rows look up field row 0 (always valid) and are sliced off below.
        x_i32 = jnp.pad(x_i32, ((0, B_pad - B), (0, 0)))

    # ---- VMEM budget: resident tables + double-buffered tiles + temporaries.
    need = (3 * FN * FD * 2                 # bf16 table chunks (resident)
            + 2 * TB * F * 4                # x tiles (double-buffered)
            + 2 * TB * FD * 4               # output tiles (double-buffered)
            + TB * FN * (4 + 1 + 2)         # iota + match + bf16 one-hot temps
            + TB * FD * 4                   # f32 accumulator
            + (4 << 20))                    # slack
    try:
        cap = int(getattr(pltpu.get_tpu_info(), "vmem_capacity_bytes", 64 << 20))
    except Exception:
        cap = 64 << 20
    vmem_limit = int(min(max(need, 16 << 20), max(cap - (8 << 20), 16 << 20)))
    # TODO(synk): tables where 3*FN*FD*2 bytes no longer fit the per-generation
    #             VMEM budget (notably v7x's 64 MiB) need the manual-DMA per-row
    #             gather path (memory_space=pl.ANY table + double-buffered async
    #             row copies) instead of the VMEM-resident one-hot matmul.

    out = pl.pallas_call(
        _make_pep_kernel(F, NP, D, TB),
        out_shape=jax.ShapeDtypeStruct((B_pad, FD), f32),
        grid_spec=pltpu.PrefetchScalarGridSpec(
            num_scalar_prefetch=1,
            grid=(B_pad // TB,),
            in_specs=[
                pl.BlockSpec((TB, F), lambda i, off: (i, 0)),        # pipelined x tiles
                pl.BlockSpec(memory_space=pltpu.MemorySpace.VMEM),   # t_hi (resident)
                pl.BlockSpec(memory_space=pltpu.MemorySpace.VMEM),   # t_mid (resident)
                pl.BlockSpec(memory_space=pltpu.MemorySpace.VMEM),   # t_lo (resident)
            ],
            out_specs=pl.BlockSpec((TB, FD), lambda i, off: (i, 0)),  # lane-dense tiles
        ),
        compiler_params=pltpu.CompilerParams(
            dimension_semantics=("parallel",),
            vmem_limit_bytes=vmem_limit,
        ),
    )(comb_off, x_i32, t_hi, t_mid, t_lo)

    return out[:B].reshape(B, F, D)


# TODO(synk): retrain branch (init_retrain loads a saved .npy mask) is a
#             checkpoint-dependent path and is intentionally not reproduced.
# TODO(synk): 'feature'/'field'(_dim) threshold_type variants need per-row /
#             per-field thresholds; only 'dimension' (and trivially 'global')
#             semantics are implemented (still exact: threshold is pre-applied
#             to the table in the wrapper).


if __name__ == "__main__":
    key = jax.random.PRNGKey(0)

    # Module hyper-parameters (small, consistent with __init__)
    field_dims = (10, 7, 5, 12)          # field_dim
    feature_num = sum(field_dims)        # 34
    field_num = len(field_dims)          # 4
    latent_dim = 32
    gk = 0.2
    threshold_init = -2.0                # threshold_type='dimension'
    batch = 4

    k_v, k_x = jax.random.split(key)

    # v: xavier_uniform_ on (feature_num, latent_dim)
    bound = float(np.sqrt(6.0 / (feature_num + latent_dim)))
    v = jax.random.uniform(k_v, (feature_num, latent_dim),
                           dtype=jnp.float32, minval=-bound, maxval=bound)

    # s: threshold_init * ones(latent_dim)
    s = jnp.full((latent_dim,), threshold_init, dtype=jnp.float32)

    # offsets = (0, *cumsum(field_dims)[:-1])
    offsets = jnp.asarray(
        np.concatenate([[0], np.cumsum(field_dims)[:-1]]).astype(np.int32))

    # x: per-field raw indices, shape (batch, field_num)
    x_keys = jax.random.split(k_x, field_num)
    x = jnp.stack(
        [jax.random.randint(kf, (batch,), 0, fd, dtype=jnp.int32)
         for kf, fd in zip(x_keys, field_dims)],
        axis=1)

    out = pep_embedding_forward(x, v, s, offsets, gk)
    out = jax.block_until_ready(out)

    # Pure-JAX reference (exact forward semantics of the PyTorch module)
    thr_ref = jax.nn.sigmoid(s)[None, :] * gk
    sparse_v_ref = jnp.sign(v) * jnp.maximum(jnp.abs(v) - thr_ref, 0.0)
    ref = sparse_v_ref[(x + offsets[None, :]).reshape(-1)].reshape(
        batch, field_num, latent_dim)

    np.testing.assert_allclose(np.asarray(out), np.asarray(ref),
                               rtol=1e-6, atol=1e-6)
    assert out.shape == (batch, field_num, latent_dim)
    assert out.dtype == jnp.float32

    print("KERNEL_OK")
</pallas_src>

<mosaic_0001>
module attributes {stable_mosaic.version = 11 : i64} {
  func.func @kernel(%arg0: i32, %arg1: memref<4xi32, #tpu.memory_space<smem>>, %arg2: memref<8x4xi32, #tpu.memory_space<vmem>>, %arg3: memref<160x128xbf16, #tpu.memory_space<vmem>>, %arg4: memref<160x128xbf16, #tpu.memory_space<vmem>>, %arg5: memref<160x128xbf16, #tpu.memory_space<vmem>>, %arg6: memref<8x128xf32, #tpu.memory_space<vmem>>) attributes {dimension_semantics = [#tpu.dimension_semantics<parallel>], iteration_bounds = array<i64: 1>, scalar_prefetch = 1 : i64, scratch_operands = 0 : i64, tpu.core_type = #tpu.core_type<tc>, window_params = [{transform_indices = @transform_0, window_bounds = array<i64: 8, 4>}, {pipeline_mode = #tpu.pipeline_mode<synchronous>, transform_indices = @transform_1, window_bounds = array<i64: 160, 128>}, {pipeline_mode = #tpu.pipeline_mode<synchronous>, transform_indices = @transform_2, window_bounds = array<i64: 160, 128>}, {pipeline_mode = #tpu.pipeline_mode<synchronous>, transform_indices = @transform_3, window_bounds = array<i64: 160, 128>}, {transform_indices = @transform_4, window_bounds = array<i64: 8, 128>}]} {
    %c0 = arith.constant 0 : index
    %c0_0 = arith.constant 0 : index
    %0 = vector.load %arg2[%c0, %c0_0] : memref<8x4xi32, #tpu.memory_space<vmem>>, vector<8x4xi32>
    %1 = tpu.iota {dimensions = array<i32: 1>} : vector<8x160xi32>
    %2 = vector.extract_strided_slice %0 {offsets = [0, 0], sizes = [8, 1], strides = [1, 1]} : vector<8x4xi32> to vector<8x1xi32>
    %c0_1 = arith.constant 0 : index
    %3 = memref.load %arg1[%c0_1] : memref<4xi32, #tpu.memory_space<smem>>
    %4 = vector.broadcast %3 : i32 to vector<8x1xi32>
    %5 = arith.addi %2, %4 : vector<8x1xi32>
    %6 = vector.broadcast %5 : vector<8x1xi32> to vector<8x160xi32>
    %7 = arith.cmpi eq, %1, %6 : vector<8x160xi32>
    %8 = vector.extract_strided_slice %0 {offsets = [0, 1], sizes = [8, 1], strides = [1, 1]} : vector<8x4xi32> to vector<8x1xi32>
    %c1 = arith.constant 1 : index
    %9 = memref.load %arg1[%c1] : memref<4xi32, #tpu.memory_space<smem>>
    %10 = vector.broadcast %9 : i32 to vector<8x1xi32>
    %11 = arith.addi %8, %10 : vector<8x1xi32>
    %12 = vector.broadcast %11 : vector<8x1xi32> to vector<8x160xi32>
    %13 = arith.cmpi eq, %1, %12 : vector<8x160xi32>
    %14 = arith.ori %7, %13 : vector<8x160xi1>
    %15 = vector.extract_strided_slice %0 {offsets = [0, 2], sizes = [8, 1], strides = [1, 1]} : vector<8x4xi32> to vector<8x1xi32>
    %c2 = arith.constant 2 : index
    %16 = memref.load %arg1[%c2] : memref<4xi32, #tpu.memory_space<smem>>
    %17 = vector.broadcast %16 : i32 to vector<8x1xi32>
    %18 = arith.addi %15, %17 : vector<8x1xi32>
    %19 = vector.broadcast %18 : vector<8x1xi32> to vector<8x160xi32>
    %20 = arith.cmpi eq, %1, %19 : vector<8x160xi32>
    %21 = arith.ori %14, %20 : vector<8x160xi1>
    %22 = vector.extract_strided_slice %0 {offsets = [0, 3], sizes = [8, 1], strides = [1, 1]} : vector<8x4xi32> to vector<8x1xi32>
    %c3 = arith.constant 3 : index
    %23 = memref.load %arg1[%c3] : memref<4xi32, #tpu.memory_space<smem>>
    %24 = vector.broadcast %23 : i32 to vector<8x1xi32>
    %25 = arith.addi %22, %24 : vector<8x1xi32>
    %26 = vector.broadcast %25 : vector<8x1xi32> to vector<8x160xi32>
    %27 = arith.cmpi eq, %1, %26 : vector<8x160xi32>
    %28 = arith.ori %21, %27 : vector<8x160xi1>
    %29 = arith.extui %28 : vector<8x160xi1> to vector<8x160xi32>
    %30 = arith.sitofp %29 : vector<8x160xi32> to vector<8x160xf32>
    %31 = arith.truncf %30 : vector<8x160xf32> to vector<8x160xbf16>
    %c0_2 = arith.constant 0 : index
    %c0_3 = arith.constant 0 : index
    %32 = vector.load %arg3[%c0_2, %c0_3] : memref<160x128xbf16, #tpu.memory_space<vmem>>, vector<160x128xbf16>
    %cst = arith.constant dense<0.000000e+00> : vector<8x128xf32>
    %33 = tpu.matmul %31, %32, %cst {dimension_numbers = #tpu.dot_dimension_numbers<[1], [0], [0], [1], [0, 0, 1, 1], [], []>} : vector<8x160xbf16>, vector<160x128xbf16>, vector<8x128xf32> -> vector<8x128xf32>
    %c0_4 = arith.constant 0 : index
    %c0_5 = arith.constant 0 : index
    %34 = vector.load %arg4[%c0_4, %c0_5] : memref<160x128xbf16, #tpu.memory_space<vmem>>, vector<160x128xbf16>
    %cst_6 = arith.constant dense<0.000000e+00> : vector<8x128xf32>
    %35 = tpu.matmul %31, %34, %cst_6 {dimension_numbers = #tpu.dot_dimension_numbers<[1], [0], [0], [1], [0, 0, 1, 1], [], []>} : vector<8x160xbf16>, vector<160x128xbf16>, vector<8x128xf32> -> vector<8x128xf32>
    %36 = arith.addf %33, %35 : vector<8x128xf32>
    %c0_7 = arith.constant 0 : index
    %c0_8 = arith.constant 0 : index
    %37 = vector.load %arg5[%c0_7, %c0_8] : memref<160x128xbf16, #tpu.memory_space<vmem>>, vector<160x128xbf16>
    %cst_9 = arith.constant dense<0.000000e+00> : vector<8x128xf32>
    %38 = tpu.matmul %31, %37, %cst_9 {dimension_numbers = #tpu.dot_dimension_numbers<[1], [0], [0], [1], [0, 0, 1, 1], [], []>} : vector<8x160xbf16>, vector<160x128xbf16>, vector<8x128xf32> -> vector<8x128xf32>
    %39 = arith.addf %36, %38 : vector<8x128xf32>
    %c0_10 = arith.constant 0 : index
    %c0_11 = arith.constant 0 : index
    %40 = vector.load %arg6[%c0_10, %c0_11] : memref<8x128xf32, #tpu.memory_space<vmem>>, vector<8x128xf32>
    tpu.vector_store %arg6[%c0_10, %c0_11], %39 {strides = array<i32>} : memref<8x128xf32, #tpu.memory_space<vmem>>, vector<8x128xf32>,
    return
  }
  func.func @transform_0(%arg0: i32, %arg1: memref<4xi32, #tpu.memory_space<smem>>) -> (i32, i32) {
    %c0_i32 = arith.constant 0 : i32
    %c0_i32_0 = arith.constant 0 : i32
    return %arg0, %c0_i32 : i32, i32
  }
  func.func @transform_1(%arg0: i32, %arg1: memref<4xi32, #tpu.memory_space<smem>>) -> (i32, i32) {
    %c0_i32 = arith.constant 0 : i32
    %c0_i32_0 = arith.constant 0 : i32
    %c0_i32_1 = arith.constant 0 : i32
    return %c0_i32, %c0_i32_0 : i32, i32
  }
  func.func @transform_2(%arg0: i32, %arg1: memref<4xi32, #tpu.memory_space<smem>>) -> (i32, i32) {
    %c0_i32 = arith.constant 0 : i32
    %c0_i32_0 = arith.constant 0 : i32
    %c0_i32_1 = arith.constant 0 : i32
    return %c0_i32, %c0_i32_0 : i32, i32
  }
  func.func @transform_3(%arg0: i32, %arg1: memref<4xi32, #tpu.memory_space<smem>>) -> (i32, i32) {
    %c0_i32 = arith.constant 0 : i32
    %c0_i32_0 = arith.constant 0 : i32
    %c0_i32_1 = arith.constant 0 : i32
    return %c0_i32, %c0_i32_0 : i32, i32
  }
  func.func @transform_4(%arg0: i32, %arg1: memref<4xi32, #tpu.memory_space<smem>>) -> (i32, i32) {
    %c0_i32 = arith.constant 0 : i32
    %c0_i32_0 = arith.constant 0 : i32
    return %arg0, %c0_i32 : i32, i32
  }
}

</mosaic_0001>

<llo_original>
// kernel: tpu_custom_call.1
$region0: #{tpu_custom_call.1}
  #allocation0 [shape = 'u32[]', space=smem, size = 0x4, offset = 0x4, fixed_abs, tag = 'smem constant byte address 0x4 - core index']
  #allocation1 [shape = 'u32[72,128]{1,0:T(1,128)}', space=vmem, size = 0x9000, scoped, tag = 'internal scratch']
  #allocation2 [shape = 's32[1]{0}', space=sflag, size = 0x4, scoped, tag = 'scoped memory for tpu_custom_call.1']
  #allocation3 [shape = 'u8[512]{0}', space=smem, size = 0x200, scoped, tag = 'prefetched SMEM operand 0']
  %s0 = inlined_call_operand.vmem [shape: s32[4], index: 0, kind: input, shape index: {}]
  %s1 = inlined_call_operand.vmem [shape: s32[8,4], index: 1, kind: input, shape index: {}]
  %s2 = inlined_call_operand.hbm [shape: bf16[160,128], index: 2, kind: input, shape index: {}]
  %s3 = inlined_call_operand.hbm [shape: bf16[160,128], index: 3, kind: input, shape index: {}]
  %s4 = inlined_call_operand.hbm [shape: bf16[160,128], index: 4, kind: input, shape index: {}]
  %s5 = inlined_call_operand.hbm [shape: f32[8,128], index: 5, kind: output, shape index: {}]
  %s6 = sld [smem:[#allocation0]]
  $region38: #{tpu_custom_call.1} parent=0
    _
  %s8 = ssub.s32 1, %s6
  %s9 = scalar_select 0, %s8, %s6
  %s11 = sshll.u32 %s0, 4
  %s12 = int_to_ptr.vmem [resolvable:$true] %s11
  %14 = dma.vmem_to_smem %s12, 16, [#allocation3], [#allocation2]
  %16 = dma.done [#allocation2], 16
  %17 = sfence
  $region1: #{tpu_custom_call.1} parent=0
    #allocation4 [shape = 'u8[40960]{0}', space=vmem, size = 0xa000, scoped, tag = 'input window, operand 2, single buffered']
    #allocation5 [shape = 's32[1]{0}', space=sflag, size = 0x4, scoped, tag = 'scoped memory for tpu_custom_call.1']
    #allocation6 [shape = 's32[1]{0}', space=sflag, size = 0x4, scoped, tag = 'scoped memory for tpu_custom_call.1']
    #allocation7 [shape = 'u8[40960]{0}', space=vmem, size = 0xa000, scoped, tag = 'input window, operand 3, single buffered']
    #allocation8 [shape = 's32[1]{0}', space=sflag, size = 0x4, scoped, tag = 'scoped memory for tpu_custom_call.1']
    #allocation9 [shape = 'u8[40960]{0}', space=vmem, size = 0xa000, scoped, tag = 'input window, operand 4, single buffered']
    #allocation10 [shape = 'u8[4096]{0}', space=vmem, size = 0x1000, scoped, tag = 'output window, operand 0, single buffered']
    %18 = vsyncpa [#allocation5], 0
    %19 = vsyncpa [#allocation8], 0
    %20 = vsyncpa [#allocation6], 0
    // Predicated region
    $region2: #{tpu_custom_call.1} parent=1 // pred_check
      _
    $region3: #{tpu_custom_call.1} parent=1 // pred_check_branch
      %22 = sbr.rel (0) target = $region5
    $region4: #{tpu_custom_call.1} parent=1 // pred_region
      _
    $region5: #{tpu_custom_call.1} parent=1 // pred_fallthru
      _
    // Predicated region
    $region6: #{tpu_custom_call.1} parent=1 // pred_check
      _
    $region7: #{tpu_custom_call.1} parent=1 // pred_check_branch
      %24 = sbr.rel (0) target = $region9
    $region8: #{tpu_custom_call.1} parent=1 // pred_region
      %26 = vsyncadd [#allocation5], 0
      %s27 = sshll.u32 %s2, 4
      %s28 = int_to_ptr.hbm [resolvable:$true] %s27
      %s29 = sshll.u32 [#allocation4], 4
      %s30 = int_to_ptr.vmem [resolvable:$true] %s29
      %35 = dma.hbm_to_vmem [thread:$0]  %s28, 1280, %s30, [#allocation5], 64, 64, 4
    $region9: #{tpu_custom_call.1} parent=1 // pred_fallthru
      _
    // Predicated region
    $region10: #{tpu_custom_call.1} parent=1 // pred_check
      _
    $region11: #{tpu_custom_call.1} parent=1 // pred_check_branch
      %37 = sbr.rel (0) target = $region13
    $region12: #{tpu_custom_call.1} parent=1 // pred_region
      %39 = vsyncadd [#allocation8], 0
      %s40 = sshll.u32 %s3, 4
      %s41 = int_to_ptr.hbm [resolvable:$true] %s40
      %s42 = sshll.u32 [#allocation7], 4
      %s43 = int_to_ptr.vmem [resolvable:$true] %s42
      %48 = dma.hbm_to_vmem [thread:$0]  %s41, 1280, %s43, [#allocation8], 64, 64, 4
    $region13: #{tpu_custom_call.1} parent=1 // pred_fallthru
      _
    // Predicated region
    $region14: #{tpu_custom_call.1} parent=1 // pred_check
      _
    $region15: #{tpu_custom_call.1} parent=1 // pred_check_branch
      %50 = sbr.rel (0) target = $region17
    $region16: #{tpu_custom_call.1} parent=1 // pred_region
      %52 = vsyncadd [#allocation8], 0
      %s53 = sshll.u32 %s4, 4
      %s54 = int_to_ptr.hbm [resolvable:$true] %s53
      %s55 = sshll.u32 [#allocation9], 4
      %s56 = int_to_ptr.vmem [resolvable:$true] %s55
      %61 = dma.hbm_to_vmem [thread:$0]  %s54, 1280, %s56, [#allocation8], 64, 64, 4
    $region17: #{tpu_custom_call.1} parent=1 // pred_fallthru
      _
    // Predicated region
    $region18: #{tpu_custom_call.1} parent=1 // pred_check
      _
    $region19: #{tpu_custom_call.1} parent=1 // pred_check_branch
      %63 = sbr.rel (0) target = $region21
    $region20: #{tpu_custom_call.1} parent=1 // pred_region
      %65 = dma.done [#allocation5], 1280
    $region21: #{tpu_custom_call.1} parent=1 // pred_fallthru
      _
    // Predicated region
    $region22: #{tpu_custom_call.1} parent=1 // pred_check
      _
    $region23: #{tpu_custom_call.1} parent=1 // pred_check_branch
      %67 = sbr.rel (0) target = $region25
    $region24: #{tpu_custom_call.1} parent=1 // pred_region
      %69 = dma.done [#allocation8], 1280
    $region25: #{tpu_custom_call.1} parent=1 // pred_fallthru
      _
    // Predicated region
    $region26: #{tpu_custom_call.1} parent=1 // pred_check
      _
    $region27: #{tpu_custom_call.1} parent=1 // pred_check_branch
      %71 = sbr.rel (0) target = $region29
    $region28: #{tpu_custom_call.1} parent=1 // pred_region
      %73 = dma.done [#allocation8], 1280
    $region29: #{tpu_custom_call.1} parent=1 // pred_fallthru
      _
    %v75 = vld [vmem:[%s1] sm:$0xff]
    %v76 = vlaneseq
    %v77 = vand.u32 %v76, 127
    %v78 = vadd.s32 %v77, 128
    %s79 = sld [smem:[#allocation3]]
    %v80 = vstv %s79
    %v81 = vadd.s32 %v75, %v80
    %82 = vset.pattern.permute.xlu0 0
    %83 = vperm.xlu0 %82, %v81
    %v84 = vpop.permute.xlu0 %83
    %vm85 = vcmp.eq.s32.totalorder %v77, %v84
    %vm86 = vcmp.eq.s32.totalorder %v78, %v84
    %s87 = sld [smem:[#allocation3 + $0x1]]
    %v88 = vstv %s87
    %v89 = vadd.s32 %v75, %v88
    %90 = vset.pattern.permute.xlu0 1
    %91 = vperm.xlu0 %90, %v89
    %v92 = vpop.permute.xlu0 %91
    %vm93 = vcmp.eq.s32.totalorder %v77, %v92
    %vm94 = vcmp.eq.s32.totalorder %v78, %v92
    %vm95 = vmor %vm85, %vm93
    %vm96 = vmor %vm86, %vm94
    %s97 = sld [smem:[#allocation3 + $0x2]]
    %v98 = vstv %s97
    %v99 = vadd.s32 %v75, %v98
    %100 = vset.pattern.permute.xlu0 2
    %101 = vperm.xlu0 %100, %v99
    %v102 = vpop.permute.xlu0 %101
    %vm103 = vcmp.eq.s32.totalorder %v77, %v102
    %vm104 = vcmp.eq.s32.totalorder %v78, %v102
    %vm105 = vmor %vm95, %vm103
    %vm106 = vmor %vm96, %vm104
    %s107 = sld [smem:[#allocation3 + $0x3]]
    %v108 = vstv %s107
    %v109 = vadd.s32 %v75, %v108
    %110 = vset.pattern.permute.xlu0 3
    %111 = vperm.xlu0 %110, %v109
    %v112 = vpop.permute.xlu0 %111
    %vm113 = vcmp.eq.s32.totalorder %v77, %v112
    %vm114 = vcmp.eq.s32.totalorder %v78, %v112
    %vm115 = vmor %vm105, %vm113
    %vm116 = vmor %vm106, %vm114
    %v117 = vsel %vm115, 1, 0
    %v118 = vsel %vm116, 1, 0
    %v119 = vcvt.s32.f32 %v117
    %v120 = vcvt.s32.f32 %v118
    %v121 = vpack.c.bf16 %v119, %v119
    %v122 = vpack.c.bf16 %v120, %v120
    %v123 = vld [vmem:[#allocation4] sm:$0xf]
    %v124 = vld [vmem:[#allocation4 + $0x4] sm:$0xf]
    %v125 = vld [vmem:[#allocation4 + $0x8] sm:$0xf]
    %v126 = vld [vmem:[#allocation4 + $0xc] sm:$0xf]
    %v127 = vld [vmem:[#allocation4 + $0x10] sm:$0xf]
    %v128 = vld [vmem:[#allocation4 + $0x14] sm:$0xf]
    %v129 = vld [vmem:[#allocation4 + $0x18] sm:$0xf]
    %v130 = vld [vmem:[#allocation4 + $0x1c] sm:$0xf]
    %v131 = vld [vmem:[#allocation4 + $0x20] sm:$0xf]
    %v132 = vld [vmem:[#allocation4 + $0x24] sm:$0xf]
    %v133 = vld [vmem:[#allocation4 + $0x28] sm:$0xf]
    %v134 = vld [vmem:[#allocation4 + $0x2c] sm:$0xf]
    %v135 = vld [vmem:[#allocation4 + $0x30] sm:$0xf]
    %v136 = vld [vmem:[#allocation4 + $0x34] sm:$0xf]
    %v137 = vld [vmem:[#allocation4 + $0x38] sm:$0xf]
    %v138 = vld [vmem:[#allocation4 + $0x3c] sm:$0xf]
    %v139 = vld [vmem:[#allocation4 + $0x40] sm:$0xf]
    %v140 = vld [vmem:[#allocation4 + $0x44] sm:$0xf]
    %v141 = vld [vmem:[#allocation4 + $0x48] sm:$0xf]
    %v142 = vld [vmem:[#allocation4 + $0x4c] sm:$0xf]
    %v143 = vld [vmem:[#allocation7] sm:$0xf]
    %v144 = vld [vmem:[#allocation7 + $0x4] sm:$0xf]
    %v145 = vld [vmem:[#allocation7 + $0x8] sm:$0xf]
    %v146 = vld [vmem:[#allocation7 + $0xc] sm:$0xf]
    %v147 = vld [vmem:[#allocation7 + $0x10] sm:$0xf]
    %v148 = vld [vmem:[#allocation7 + $0x14] sm:$0xf]
    %v149 = vld [vmem:[#allocation7 + $0x18] sm:$0xf]
    %v150 = vld [vmem:[#allocation7 + $0x1c] sm:$0xf]
    %v151 = vld [vmem:[#allocation7 + $0x20] sm:$0xf]
    %v152 = vld [vmem:[#allocation7 + $0x24] sm:$0xf]
    %v153 = vld [vmem:[#allocation7 + $0x28] sm:$0xf]
    %v154 = vld [vmem:[#allocation7 + $0x2c] sm:$0xf]
    %v155 = vld [vmem:[#allocation7 + $0x30] sm:$0xf]
    %v156 = vld [vmem:[#allocation7 + $0x34] sm:$0xf]
    %v157 = vld [vmem:[#allocation7 + $0x38] sm:$0xf]
    %v158 = vld [vmem:[#allocation7 + $0x3c] sm:$0xf]
    %v159 = vld [vmem:[#allocation7 + $0x40] sm:$0xf]
    %v160 = vld [vmem:[#allocation7 + $0x44] sm:$0xf]
    %v161 = vld [vmem:[#allocation7 + $0x48] sm:$0xf]
    %v162 = vld [vmem:[#allocation7 + $0x4c] sm:$0xf]
    %v183 = vunpack.c.l.b16 %v143
    %v184 = vunpack.c.l.b16 %v144
    %v185 = vunpack.c.l.b16 %v145
    %v186 = vunpack.c.l.b16 %v146
    %v187 = vunpack.c.l.b16 %v147
    %v188 = vunpack.c.l.b16 %v148
    %v189 = vunpack.c.l.b16 %v149
    %v190 = vunpack.c.l.b16 %v150
    %v191 = vunpack.c.l.b16 %v151
    %v192 = vunpack.c.l.b16 %v152
    %v193 = vunpack.c.l.b16 %v153
    %v194 = vunpack.c.l.b16 %v154
    %v195 = vunpack.c.l.b16 %v155
    %v196 = vunpack.c.l.b16 %v156
    %v197 = vunpack.c.l.b16 %v157
    %v198 = vunpack.c.l.b16 %v158
    %v199 = vunpack.c.l.b16 %v159
    %v200 = vunpack.c.l.b16 %v160
    %v201 = vunpack.c.l.b16 %v161
    %v202 = vunpack.c.l.b16 %v162
    %v203 = vpack.c.b16 %v184, %v183
    %v204 = vpack.c.b16 %v186, %v185
    %v205 = vpack.c.b16 %v188, %v187
    %v206 = vpack.c.b16 %v190, %v189
    %v207 = vpack.c.b16 %v192, %v191
    %v208 = vpack.c.b16 %v194, %v193
    %v209 = vpack.c.b16 %v196, %v195
    %v210 = vpack.c.b16 %v198, %v197
    %v211 = vpack.c.b16 %v200, %v199
    %v212 = vpack.c.b16 %v202, %v201
    %vm223 = vcmask 261120
    %v225 = vsel %vm223, %v122, 0
    %227 = vmatpush.bf16.msra.mxu0 %v210
    %228 = vmatpush.bf16.msra.mxu0 %v209
    %229 = vmatpush.bf16.msra.mxu0 %v208
    %230 = vmatpush.bf16.msra.mxu0 %v207
    %231 = vmatpush.bf16.msra.mxu0 %v206
    %232 = vmatpush.bf16.msra.mxu0 %v205
    %233 = vmatpush.bf16.msra.mxu0 %v204
    %234 = vmatpush.bf16.msra.mxu0 %v203
    %235 = vmatmul.bf16.gmra.mxu0 %v121
    %v236 = vpop.f32.mrf.mxu0
    %v237 = vadd.f32 0.0, %v236
    %v238 = vpop.f32.mrf.mxu0
    %239 = vdwg.mxu0
    %240 = vmatpush.bf16.msra.mxu0 0
    %241 = vmatpush.bf16.msra.mxu0 0
    %242 = vmatpush.bf16.msra.mxu0 0
    %243 = vmatpush.bf16.msra.mxu0 0
    %244 = vmatpush.bf16.msra.mxu0 0
    %245 = vmatpush.bf16.msra.mxu0 0
    %246 = vmatpush.bf16.msra.mxu0 %v212
    %247 = vmatpush.bf16.msra.mxu0 %v211
    %248 = vmatmul.bf16.gmra.mxu0 %v225
    %v249 = vpop.f32.mrf.mxu0
    %v250 = vadd.f32 %v237, %v249
    %v251 = vpop.f32.mrf.mxu0
    %252 = vdwg.mxu0
    %v273 = vunpack.c.l.b16 %v123
    %v274 = vunpack.c.l.b16 %v124
    %v275 = vunpack.c.l.b16 %v125
    %v276 = vunpack.c.l.b16 %v126
    %v277 = vunpack.c.l.b16 %v127
    %v278 = vunpack.c.l.b16 %v128
    %v279 = vunpack.c.l.b16 %v129
    %v280 = vunpack.c.l.b16 %v130
    %v281 = vunpack.c.l.b16 %v131
    %v282 = vunpack.c.l.b16 %v132
    %v283 = vunpack.c.l.b16 %v133
    %v284 = vunpack.c.l.b16 %v134
    %v285 = vunpack.c.l.b16 %v135
    %v286 = vunpack.c.l.b16 %v136
    %v287 = vunpack.c.l.b16 %v137
    %v288 = vunpack.c.l.b16 %v138
    %v289 = vunpack.c.l.b16 %v139
    %v290 = vunpack.c.l.b16 %v140
    %v291 = vunpack.c.l.b16 %v141
    %v292 = vunpack.c.l.b16 %v142
    %v293 = vpack.c.b16 %v274, %v273
    %v294 = vpack.c.b16 %v276, %v275
    %v295 = vpack.c.b16 %v278, %v277
    %v296 = vpack.c.b16 %v280, %v279
    %v297 = vpack.c.b16 %v282, %v281
    %v298 = vpack.c.b16 %v284, %v283
    %v299 = vpack.c.b16 %v286, %v285
    %v300 = vpack.c.b16 %v288, %v287
    %v301 = vpack.c.b16 %v290, %v289
    %v302 = vpack.c.b16 %v292, %v291
    %313 = vmatpush.bf16.msra.mxu0 %v300
    %314 = vmatpush.bf16.msra.mxu0 %v299
    %315 = vmatpush.bf16.msra.mxu0 %v298
    %316 = vmatpush.bf16.msra.mxu0 %v297
    %317 = vmatpush.bf16.msra.mxu0 %v296
    %318 = vmatpush.bf16.msra.mxu0 %v295
    %319 = vmatpush.bf16.msra.mxu0 %v294
    %320 = vmatpush.bf16.msra.mxu0 %v293
    %321 = vmatmul.bf16.gmra.mxu0 %v121
    %v322 = vpop.f32.mrf.mxu0
    %v323 = vadd.f32 %v250, %v322
    %v324 = vpop.f32.mrf.mxu0
    %325 = vdwg.mxu0
    %326 = vmatpush.bf16.msra.mxu0 0
    %327 = vmatpush.bf16.msra.mxu0 0
    %328 = vmatpush.bf16.msra.mxu0 0
    %329 = vmatpush.bf16.msra.mxu0 0
    %330 = vmatpush.bf16.msra.mxu0 0
    %331 = vmatpush.bf16.msra.mxu0 0
    %332 = vmatpush.bf16.msra.mxu0 %v302
    %333 = vmatpush.bf16.msra.mxu0 %v301
    %334 = vmatmul.bf16.gmra.mxu0 %v225
    %v335 = vpop.f32.mrf.mxu0
    %v336 = vadd.f32 %v323, %v335
    %v337 = vpop.f32.mrf.mxu0
    %338 = vdwg.mxu0
    %v339 = vld [vmem:[#allocation9] sm:$0xf]
    %v340 = vld [vmem:[#allocation9 + $0x4] sm:$0xf]
    %v341 = vld [vmem:[#allocation9 + $0x8] sm:$0xf]
    %v342 = vld [vmem:[#allocation9 + $0xc] sm:$0xf]
    %v343 = vld [vmem:[#allocation9 + $0x10] sm:$0xf]
    %v344 = vld [vmem:[#allocation9 + $0x14] sm:$0xf]
    %v345 = vld [vmem:[#allocation9 + $0x18] sm:$0xf]
    %v346 = vld [vmem:[#allocation9 + $0x1c] sm:$0xf]
    %v347 = vld [vmem:[#allocation9 + $0x20] sm:$0xf]
    %v348 = vld [vmem:[#allocation9 + $0x24] sm:$0xf]
    %v349 = vld [vmem:[#allocation9 + $0x28] sm:$0xf]
    %v350 = vld [vmem:[#allocation9 + $0x2c] sm:$0xf]
    %v351 = vld [vmem:[#allocation9 + $0x30] sm:$0xf]
    %v352 = vld [vmem:[#allocation9 + $0x34] sm:$0xf]
    %v353 = vld [vmem:[#allocation9 + $0x38] sm:$0xf]
    %v354 = vld [vmem:[#allocation9 + $0x3c] sm:$0xf]
    %v355 = vld [vmem:[#allocation9 + $0x40] sm:$0xf]
    %v356 = vld [vmem:[#allocation9 + $0x44] sm:$0xf]
    %v357 = vld [vmem:[#allocation9 + $0x48] sm:$0xf]
    %v358 = vld [vmem:[#allocation9 + $0x4c] sm:$0xf]
    %v379 = vunpack.c.l.b16 %v339
    %v380 = vunpack.c.l.b16 %v340
    %v381 = vunpack.c.l.b16 %v341
    %v382 = vunpack.c.l.b16 %v342
    %v383 = vunpack.c.l.b16 %v343
    %v384 = vunpack.c.l.b16 %v344
    %v385 = vunpack.c.l.b16 %v345
    %v386 = vunpack.c.l.b16 %v346
    %v387 = vunpack.c.l.b16 %v347
    %v388 = vunpack.c.l.b16 %v348
    %v389 = vunpack.c.l.b16 %v349
    %v390 = vunpack.c.l.b16 %v350
    %v391 = vunpack.c.l.b16 %v351
    %v392 = vunpack.c.l.b16 %v352
    %v393 = vunpack.c.l.b16 %v353
    %v394 = vunpack.c.l.b16 %v354
    %v395 = vunpack.c.l.b16 %v355
    %v396 = vunpack.c.l.b16 %v356
    %v397 = vunpack.c.l.b16 %v357
    %v398 = vunpack.c.l.b16 %v358
    %v399 = vpack.c.b16 %v380, %v379
    %v400 = vpack.c.b16 %v382, %v381
    %v401 = vpack.c.b16 %v384, %v383
    %v402 = vpack.c.b16 %v386, %v385
    %v403 = vpack.c.b16 %v388, %v387
    %v404 = vpack.c.b16 %v390, %v389
    %v405 = vpack.c.b16 %v392, %v391
    %v406 = vpack.c.b16 %v394, %v393
    %v407 = vpack.c.b16 %v396, %v395
    %v408 = vpack.c.b16 %v398, %v397
    %419 = vmatpush.bf16.msra.mxu0 %v406
    %420 = vmatpush.bf16.msra.mxu0 %v405
    %421 = vmatpush.bf16.msra.mxu0 %v404
    %422 = vmatpush.bf16.msra.mxu0 %v403
    %423 = vmatpush.bf16.msra.mxu0 %v402
    %424 = vmatpush.bf16.msra.mxu0 %v401
    %425 = vmatpush.bf16.msra.mxu0 %v400
    %426 = vmatpush.bf16.msra.mxu0 %v399
    %427 = vmatmul.bf16.gmra.mxu0 %v121
    %v428 = vpop.f32.mrf.mxu0
    %v429 = vadd.f32 0.0, %v428
    %v430 = vpop.f32.mrf.mxu0
    %431 = vdwg.mxu0
    %432 = vmatpush.bf16.msra.mxu0 0
    %433 = vmatpush.bf16.msra.mxu0 0
    %434 = vmatpush.bf16.msra.mxu0 0
    %435 = vmatpush.bf16.msra.mxu0 0
    %436 = vmatpush.bf16.msra.mxu0 0
    %437 = vmatpush.bf16.msra.mxu0 0
    %438 = vmatpush.bf16.msra.mxu0 %v408
    %439 = vmatpush.bf16.msra.mxu0 %v407
    %440 = vmatmul.bf16.gmra.mxu0 %v225
    %v441 = vpop.f32.mrf.mxu0
    %v442 = vadd.f32 %v429, %v441
    %v443 = vpop.f32.mrf.mxu0
    %444 = vdwg.mxu0
    %v445 = vadd.f32 %v336, %v442
    %446 = vst [vmem:[#allocation10] sm:$0xff] %v445
    // Predicated region
    $region30: #{tpu_custom_call.1} parent=1 // pred_check
      _
    $region31: #{tpu_custom_call.1} parent=1 // pred_check_branch
      %448 = sbr.rel (0) target = $region33
    $region32: #{tpu_custom_call.1} parent=1 // pred_region
      %450 = vsyncadd [#allocation6], 0
      %s452 = sshll.u32 [#allocation10], 4
      %s453 = int_to_ptr.vmem [resolvable:$true] %s452
      %s454 = sshll.u32 %s5, 4
      %s455 = int_to_ptr.hbm [resolvable:$true] %s454
      %457 = dma.vmem_to_hbm [thread:$0]  %s453, 128, %s455, [#allocation6]
    $region33: #{tpu_custom_call.1} parent=1 // pred_fallthru
      _
    // Predicated region
    $region34: #{tpu_custom_call.1} parent=1 // pred_check
      _
    $region35: #{tpu_custom_call.1} parent=1 // pred_check_branch
      %459 = sbr.rel (0) target = $region37
    $region36: #{tpu_custom_call.1} parent=1 // pred_region
      %461 = dma.done [#allocation6], 128
    $region37: #{tpu_custom_call.1} parent=1 // pred_fallthru
      _
    %462 = vsyncpa [#allocation5], 1
    %463 = vsyncpa [#allocation8], 1
    %464 = vsyncpa [#allocation6], 1

</llo_original>
